<compile_context>
chip_gen: v5e
topology: v5e:2x2
jax: 0.10.0
libtpu: 0.0.40
codegen_flags: <defaults>
</compile_context>

<pallas_src>
import numpy as np
import jax
import jax.numpy as jnp
from jax.experimental import pallas as pl
from jax.experimental.pallas import tpu as pltpu

N_BINS = 15
_BINS_PAD = 128  # lane width; bins live in lanes [0, N_BINS)
_BIN_BOUNDARIES = np.linspace(0.0, 1.0, N_BINS + 1, dtype=np.float32)

# (2, 128) boundary slab: row 0 = lowers, row 1 = uppers.
# Padding lanes get (+inf, -inf) so no confidence can ever land in them.
_BOUNDS_HOST = np.empty((2, _BINS_PAD), dtype=np.float32)
_BOUNDS_HOST[0, :] = np.inf
_BOUNDS_HOST[1, :] = -np.inf
_BOUNDS_HOST[0, :N_BINS] = _BIN_BOUNDARIES[:-1]
_BOUNDS_HOST[1, :N_BINS] = _BIN_BOUNDARIES[1:]


def _cdiv(a, b):
    return -(-a // b)


def _vmem_capacity_bytes():
    """Physical VMEM per core; conservative (v7x = 64 MiB) if unqueryable."""
    try:
        cap = int(pltpu.get_tpu_info().vmem_capacity_bytes)
        if cap > 0:
            return cap
    except Exception:
        pass
    return 64 * 1024 * 1024


def _default_splits(total_tiles):
    """2 parallel partial slabs only where there are 2 TensorCores (v7x)."""
    if total_tiles < 2:
        return 1
    try:
        kind = jax.devices()[0].device_kind.lower()
    except Exception:
        return 1
    return 2 if "v7" in kind else 1


def _pick_tile(n, c, itemsize, vmem_cap):
    # Per-block logits byte budget: large enough to hide the ~600-cycle
    # per-grid-step overhead, small enough that 2 pipeline buffers of
    # (logits + labels) fit comfortably under the scoped VMEM limit on every
    # generation (v7x has only 64 MiB physical VMEM).
    budget = min(16 * 1024 * 1024, max(4 * 1024 * 1024, vmem_cap // 8))
    t = budget // max(c * itemsize, 1)
    t = max(8, (int(t) // 8) * 8)   # f32 sublane multiple; 8-row floor for huge C
    if t >= n:
        return n                    # full-extent block is always legal
    return t


def _make_kernel(n_rows, tile_n, tiles_per_split):
    def kernel(bounds_ref, logits_ref, labels_ref, part_ref):
        s = pl.program_id(0)
        i = pl.program_id(1)

        @pl.when(i == 0)
        def _():
            part_ref[...] = jnp.zeros_like(part_ref)

        logits = logits_ref[...].astype(jnp.float32)           # (tile_n, C)
        labels = labels_ref[...]                                # (tile_n, 1) i32
        tn, c = logits.shape

        # Row-validity mask (partial last tile and clamped duplicate tiles
        # from the parallel split contribute nothing).
        tile_idx = s * tiles_per_split + i
        row0 = tile_idx * tile_n
        rows = jax.lax.broadcasted_iota(jnp.int32, (tn, 1), 0) + row0
        valid = rows < n_rows                                    # (tile_n, 1)

        # confidences, predictions = torch.max(softmaxes, 1)
        conf_raw = jnp.max(logits, axis=1, keepdims=True)        # (tile_n, 1)
        col_ids = jax.lax.broadcasted_iota(jnp.int32, (tn, c), 1)
        pred = jnp.min(jnp.where(logits == conf_raw, col_ids, c),
                       axis=1, keepdims=True)                    # first argmax
        acc_raw = (pred == labels).astype(jnp.float32)

        # Mask via select so NaN/garbage from edge-block padding never
        # reaches the sums (invalid rows get conf=0 -> fall in no bin).
        conf = jnp.where(valid, conf_raw, jnp.float32(0.0))
        acc = jnp.where(valid, acc_raw, jnp.float32(0.0))

        # Lane-vectorized bin membership against VMEM-resident boundaries:
        # exact reference semantics  lower < conf <= upper.
        lowers = bounds_ref[0:1, :]                              # (1, 128)
        uppers = bounds_ref[1:2, :]                              # (1, 128)
        in_bin = jnp.logical_and(conf > lowers, conf <= uppers)  # (tile_n,128)
        in_bin = in_bin.astype(jnp.float32)

        # Per-bin partial sums, accumulated row-by-row into the resident
        # (3, 128) slab (no concatenate / sublane shuffle in the hot loop).
        part_ref[0:1, :] += jnp.sum(in_bin, axis=0, keepdims=True)
        part_ref[1:2, :] += jnp.sum(in_bin * conf, axis=0, keepdims=True)
        part_ref[2:3, :] += jnp.sum(in_bin * acc, axis=0, keepdims=True)

    return kernel


def ece_loss_pallas(logits, labels, *, tile_n=None, splits=None):
    """logits: (N, C) probabilities, labels: (N,). Returns (1,) float32."""
    n, c = logits.shape
    itemsize = jnp.dtype(logits.dtype).itemsize
    labels2d = labels.reshape(n, 1).astype(jnp.int32)
    bounds = jnp.asarray(_BOUNDS_HOST)

    vmem_cap = _vmem_capacity_bytes()
    if tile_n is None:
        tile_n = _pick_tile(n, c, itemsize, vmem_cap)
    total_tiles = _cdiv(n, tile_n)
    if splits is None:
        splits = _default_splits(total_tiles)
    tiles_per_split = _cdiv(total_tiles, splits)

    # Generation-aware VMEM budget: double-buffered (logits + labels) blocks
    # plus headroom, never more than ~3/4 of physical VMEM.
    block_bytes = tile_n * (c * itemsize + 4)
    vmem_limit = int(min(max(32 * 1024 * 1024, 4 * block_bytes + 4 * 1024 * 1024),
                         vmem_cap * 3 // 4))

    def idx_map(s, i):
        t = jnp.minimum(s * tiles_per_split + i, total_tiles - 1)
        return (t, 0)

    kernel = _make_kernel(n, tile_n, tiles_per_split)

    cost = pl.CostEstimate(
        flops=6 * n * c + 4 * n * _BINS_PAD,
        transcendentals=0,
        bytes_accessed=(n * c * itemsize + n * 4 + 2 * _BINS_PAD * 4
                        + splits * 3 * _BINS_PAD * 4))

    partials = pl.pallas_call(
        kernel,
        out_shape=jax.ShapeDtypeStruct((splits, 3, _BINS_PAD), jnp.float32),
        grid=(splits, tiles_per_split),
        in_specs=[
            pl.BlockSpec((2, _BINS_PAD), lambda s, i: (0, 0)),   # boundaries
            pl.BlockSpec((tile_n, c), idx_map),                  # logits tile
            pl.BlockSpec((tile_n, 1), idx_map),                  # labels tile
        ],
        out_specs=pl.BlockSpec((None, 3, _BINS_PAD), lambda s, i: (s, 0, 0)),
        compiler_params=pltpu.CompilerParams(
            dimension_semantics=("parallel", "arbitrary"),
            vmem_limit_bytes=vmem_limit),
        cost_estimate=cost,
    )(bounds, logits, labels2d)

    # Tiny finalize (O(n_bins) math) outside the streaming path; the
    # data-dependent `if prop_in_bin > 0` becomes a masked where.
    sums = jnp.sum(partials, axis=0)                    # (3, 128)
    counts = sums[0, :N_BINS]
    sum_conf = sums[1, :N_BINS]
    sum_acc = sums[2, :N_BINS]
    safe = jnp.maximum(counts, jnp.float32(1.0))
    avg_conf = sum_conf / safe
    acc_in = sum_acc / safe
    prop = counts / jnp.float32(n)
    contrib = jnp.where(counts > 0, jnp.abs(avg_conf - acc_in) * prop, 0.0)
    ece = jnp.sum(contrib) * jnp.float32(100.0)
    return ece.reshape(1)


def ece_loss_ref(logits, labels):
    """Pure-NumPy reference mirroring the PyTorch module."""
    probs = np.asarray(logits, dtype=np.float32)
    lab = np.asarray(labels)
    conf = probs.max(axis=1)
    pred = probs.argmax(axis=1)
    acc = (pred == lab).astype(np.float32)
    ece = 0.0
    for b in range(N_BINS):
        lower = float(_BIN_BOUNDARIES[b])
        upper = float(_BIN_BOUNDARIES[b + 1])
        in_bin = (conf > lower) & (conf <= upper)
        prop = in_bin.mean()
        if prop > 0:
            acc_in = acc[in_bin].mean()
            conf_in = conf[in_bin].mean()
            ece += abs(conf_in - acc_in) * prop
    return np.array([ece * 100.0], dtype=np.float32)


if __name__ == "__main__":
    key = jax.random.PRNGKey(0)
    k1, k2, k3, k4 = jax.random.split(key, 4)

    # Case 1: N=128 samples, C=8 classes (single full-extent tile).
    raw = jax.random.normal(k1, (128, 8), dtype=jnp.float32)
    probs = jax.nn.softmax(raw, axis=1)   # forward expects pre-softmaxed scores
    labels = jax.random.randint(k2, (128,), 0, 8, dtype=jnp.int32)
    out = jax.block_until_ready(ece_loss_pallas(probs, labels))
    ref = ece_loss_ref(np.asarray(probs), np.asarray(labels))
    np.testing.assert_allclose(np.asarray(out), ref, rtol=1e-4, atol=1e-4)

    # Case 2: exercises the tiled / partial-last-tile / 2-split path
    # (N=200 rows, tile_n=64 -> 4 tiles, last one partial, 2 parallel splits).
    raw2 = jax.random.normal(k3, (200, 8), dtype=jnp.float32)
    probs2 = jax.nn.softmax(raw2, axis=1)
    labels2 = jax.random.randint(k4, (200,), 0, 8, dtype=jnp.int32)
    out2 = jax.block_until_ready(
        ece_loss_pallas(probs2, labels2, tile_n=64, splits=2))
    ref2 = ece_loss_ref(np.asarray(probs2), np.asarray(labels2))
    np.testing.assert_allclose(np.asarray(out2), ref2, rtol=1e-4, atol=1e-4)

    print("KERNEL_OK")
</pallas_src>

<mosaic_0001>
module attributes {stable_mosaic.version = 11 : i64} {
  func.func @kernel(%arg0: i32, %arg1: i32, %arg2: memref<2x128xf32, #tpu.memory_space<vmem>>, %arg3: memref<128x8xf32, #tpu.memory_space<vmem>>, %arg4: memref<128x1xi32, #tpu.memory_space<vmem>>, %arg5: memref<1x3x128xf32, #tpu.memory_space<vmem>>) attributes {dimension_semantics = [#tpu.dimension_semantics<parallel>, #tpu.dimension_semantics<arbitrary>], iteration_bounds = array<i64: 1, 1>, scalar_prefetch = 0 : i64, scratch_operands = 0 : i64, tpu.core_type = #tpu.core_type<tc>, window_params = [{pipeline_mode = #tpu.pipeline_mode<synchronous>, transform_indices = @transform_0, window_bounds = array<i64: 2, 128>}, {transform_indices = @transform_1, window_bounds = array<i64: 128, 8>}, {transform_indices = @transform_2, window_bounds = array<i64: 128, 1>}, {transform_indices = @transform_3, window_bounds = array<i64: 1, 3, 128>}]} {
    %c0_i32 = arith.constant 0 : i32
    %0 = arith.cmpi eq, %arg1, %c0_i32 : i32
    %1 = arith.extui %0 : i1 to i32
    %c0_i32_0 = arith.constant 0 : i32
    %2 = arith.cmpi ne, %1, %c0_i32_0 : i32
    scf.if %2 {
      %cst_31 = arith.constant 0.000000e+00 : f32
      %68 = vector.broadcast %cst_31 : f32 to vector<3x128xf32>
      %c0_32 = arith.constant 0 : index
      %c0_33 = arith.constant 0 : index
      %c0_34 = arith.constant 0 : index
      %69 = vector.load %arg5[%c0_32, %c0_33, %c0_34] : memref<1x3x128xf32, #tpu.memory_space<vmem>>, vector<1x3x128xf32>
      %70 = vector.shape_cast %69 : vector<1x3x128xf32> to vector<3x128xf32>
      %71 = vector.shape_cast %68 : vector<3x128xf32> to vector<1x3x128xf32>
      tpu.vector_store %arg5[%c0_32, %c0_33, %c0_34], %71 {strides = array<i32>} : memref<1x3x128xf32, #tpu.memory_space<vmem>>, vector<1x3x128xf32>,
    } else {
    }
    %c0 = arith.constant 0 : index
    %c0_1 = arith.constant 0 : index
    %3 = vector.load %arg3[%c0, %c0_1] : memref<128x8xf32, #tpu.memory_space<vmem>>, vector<128x8xf32>
    %c0_2 = arith.constant 0 : index
    %c0_3 = arith.constant 0 : index
    %4 = vector.load %arg4[%c0_2, %c0_3] : memref<128x1xi32, #tpu.memory_space<vmem>>, vector<128x1xi32>
    %c1_i32 = arith.constant 1 : i32
    %5 = arith.muli %arg0, %c1_i32 : i32
    %6 = arith.addi %5, %arg1 : i32
    %c128_i32 = arith.constant 128 : i32
    %7 = arith.muli %6, %c128_i32 : i32
    %8 = tpu.iota {dimensions = array<i32: 0>} : vector<128x1xi32>
    %9 = vector.broadcast %7 : i32 to vector<128x1xi32>
    %10 = arith.addi %8, %9 : vector<128x1xi32>
    %c128_i32_4 = arith.constant 128 : i32
    %11 = vector.broadcast %c128_i32_4 : i32 to vector<128x1xi32>
    %12 = arith.cmpi slt, %10, %11 : vector<128x1xi32>
    %cst = arith.constant dense<0xFF800000> : vector<128xf32>
    %13 = vector.multi_reduction <maximumf>, %3, %cst [1] : vector<128x8xf32> to vector<128xf32>
    %14 = vector.shape_cast %13 : vector<128xf32> to vector<128x1xf32>
    %15 = tpu.iota {dimensions = array<i32: 1>} : vector<128x8xi32>
    %16 = vector.broadcast %14 : vector<128x1xf32> to vector<128x8xf32>
    %17 = arith.cmpf oeq, %3, %16 : vector<128x8xf32>
    %c8_i32 = arith.constant 8 : i32
    %18 = vector.broadcast %c8_i32 : i32 to vector<128x8xi32>
    %19 = arith.select %17, %15, %18 : vector<128x8xi1>, vector<128x8xi32>
    %cst_5 = arith.constant dense<2147483647> : vector<128xi32>
    %20 = vector.multi_reduction <minsi>, %19, %cst_5 [1] : vector<128x8xi32> to vector<128xi32>
    %21 = vector.shape_cast %20 : vector<128xi32> to vector<128x1xi32>
    %22 = arith.cmpi eq, %21, %4 : vector<128x1xi32>
    %23 = arith.extui %22 : vector<128x1xi1> to vector<128x1xi32>
    %24 = arith.sitofp %23 : vector<128x1xi32> to vector<128x1xf32>
    %cst_6 = arith.constant 0.000000e+00 : f32
    %25 = vector.broadcast %cst_6 : f32 to vector<128x1xf32>
    %26 = arith.select %12, %14, %25 : vector<128x1xi1>, vector<128x1xf32>
    %cst_7 = arith.constant 0.000000e+00 : f32
    %27 = vector.broadcast %cst_7 : f32 to vector<128x1xf32>
    %28 = arith.select %12, %24, %27 : vector<128x1xi1>, vector<128x1xf32>
    %c0_8 = arith.constant 0 : index
    %c0_9 = arith.constant 0 : index
    %29 = vector.load %arg2[%c0_8, %c0_9] : memref<2x128xf32, #tpu.memory_space<vmem>>, vector<1x128xf32>
    %c1 = arith.constant 1 : index
    %c0_10 = arith.constant 0 : index
    %30 = vector.load %arg2[%c1, %c0_10] : memref<2x128xf32, #tpu.memory_space<vmem>>, vector<1x128xf32>
    %31 = vector.broadcast %26 : vector<128x1xf32> to vector<128x128xf32>
    %32 = vector.broadcast %29 : vector<1x128xf32> to vector<128x128xf32>
    %33 = arith.cmpf ogt, %31, %32 : vector<128x128xf32>
    %34 = vector.broadcast %26 : vector<128x1xf32> to vector<128x128xf32>
    %35 = vector.broadcast %30 : vector<1x128xf32> to vector<128x128xf32>
    %36 = arith.cmpf ole, %34, %35 : vector<128x128xf32>
    %37 = arith.andi %33, %36 : vector<128x128xi1>
    %38 = arith.extui %37 : vector<128x128xi1> to vector<128x128xi32>
    %39 = arith.sitofp %38 : vector<128x128xi32> to vector<128x128xf32>
    %c0_11 = arith.constant 0 : index
    %c0_12 = arith.constant 0 : index
    %c0_13 = arith.constant 0 : index
    %40 = vector.load %arg5[%c0_11, %c0_12, %c0_13] : memref<1x3x128xf32, #tpu.memory_space<vmem>>, vector<1x1x128xf32>
    %41 = vector.shape_cast %40 : vector<1x1x128xf32> to vector<1x128xf32>
    %cst_14 = arith.constant dense<0.000000e+00> : vector<128xf32>
    %42 = vector.multi_reduction <add>, %39, %cst_14 [0] : vector<128x128xf32> to vector<128xf32>
    %43 = vector.shape_cast %42 : vector<128xf32> to vector<1x128xf32>
    %44 = arith.addf %41, %43 : vector<1x128xf32>
    %c0_15 = arith.constant 0 : index
    %c0_16 = arith.constant 0 : index
    %c0_17 = arith.constant 0 : index
    %45 = vector.load %arg5[%c0_15, %c0_16, %c0_17] : memref<1x3x128xf32, #tpu.memory_space<vmem>>, vector<1x1x128xf32>
    %46 = vector.shape_cast %45 : vector<1x1x128xf32> to vector<1x128xf32>
    %47 = vector.shape_cast %44 : vector<1x128xf32> to vector<1x1x128xf32>
    tpu.vector_store %arg5[%c0_15, %c0_16, %c0_17], %47 {strides = array<i32>} : memref<1x3x128xf32, #tpu.memory_space<vmem>>, vector<1x1x128xf32>,
    %c0_18 = arith.constant 0 : index
    %c1_19 = arith.constant 1 : index
    %c0_20 = arith.constant 0 : index
    %48 = vector.load %arg5[%c0_18, %c1_19, %c0_20] : memref<1x3x128xf32, #tpu.memory_space<vmem>>, vector<1x1x128xf32>
    %49 = vector.shape_cast %48 : vector<1x1x128xf32> to vector<1x128xf32>
    %50 = vector.broadcast %26 : vector<128x1xf32> to vector<128x128xf32>
    %51 = arith.mulf %39, %50 : vector<128x128xf32>
    %cst_21 = arith.constant dense<0.000000e+00> : vector<128xf32>
    %52 = vector.multi_reduction <add>, %51, %cst_21 [0] : vector<128x128xf32> to vector<128xf32>
    %53 = vector.shape_cast %52 : vector<128xf32> to vector<1x128xf32>
    %54 = arith.addf %49, %53 : vector<1x128xf32>
    %c0_22 = arith.constant 0 : index
    %c1_23 = arith.constant 1 : index
    %c0_24 = arith.constant 0 : index
    %55 = vector.load %arg5[%c0_22, %c1_23, %c0_24] : memref<1x3x128xf32, #tpu.memory_space<vmem>>, vector<1x1x128xf32>
    %56 = vector.shape_cast %55 : vector<1x1x128xf32> to vector<1x128xf32>
    %57 = vector.shape_cast %54 : vector<1x128xf32> to vector<1x1x128xf32>
    tpu.vector_store %arg5[%c0_22, %c1_23, %c0_24], %57 {strides = array<i32>} : memref<1x3x128xf32, #tpu.memory_space<vmem>>, vector<1x1x128xf32>,
    %c0_25 = arith.constant 0 : index
    %c2 = arith.constant 2 : index
    %c0_26 = arith.constant 0 : index
    %58 = vector.load %arg5[%c0_25, %c2, %c0_26] : memref<1x3x128xf32, #tpu.memory_space<vmem>>, vector<1x1x128xf32>
    %59 = vector.shape_cast %58 : vector<1x1x128xf32> to vector<1x128xf32>
    %60 = vector.broadcast %28 : vector<128x1xf32> to vector<128x128xf32>
    %61 = arith.mulf %39, %60 : vector<128x128xf32>
    %cst_27 = arith.constant dense<0.000000e+00> : vector<128xf32>
    %62 = vector.multi_reduction <add>, %61, %cst_27 [0] : vector<128x128xf32> to vector<128xf32>
    %63 = vector.shape_cast %62 : vector<128xf32> to vector<1x128xf32>
    %64 = arith.addf %59, %63 : vector<1x128xf32>
    %c0_28 = arith.constant 0 : index
    %c2_29 = arith.constant 2 : index
    %c0_30 = arith.constant 0 : index
    %65 = vector.load %arg5[%c0_28, %c2_29, %c0_30] : memref<1x3x128xf32, #tpu.memory_space<vmem>>, vector<1x1x128xf32>
    %66 = vector.shape_cast %65 : vector<1x1x128xf32> to vector<1x128xf32>
    %67 = vector.shape_cast %64 : vector<1x128xf32> to vector<1x1x128xf32>
    tpu.vector_store %arg5[%c0_28, %c2_29, %c0_30], %67 {strides = array<i32>} : memref<1x3x128xf32, #tpu.memory_space<vmem>>, vector<1x1x128xf32>,
    return
  }
  func.func @transform_0(%arg0: i32, %arg1: i32) -> (i32, i32) {
    %c0_i32 = arith.constant 0 : i32
    %c0_i32_0 = arith.constant 0 : i32
    %c0_i32_1 = arith.constant 0 : i32
    return %c0_i32, %c0_i32_0 : i32, i32
  }
  func.func @transform_1(%arg0: i32, %arg1: i32) -> (i32, i32) {
    %c1_i32 = arith.constant 1 : i32
    %0 = arith.muli %arg0, %c1_i32 : i32
    %1 = arith.addi %0, %arg1 : i32
    %c0_i32 = arith.constant 0 : i32
    %2 = arith.minsi %1, %c0_i32 : i32
    %c0_i32_0 = arith.constant 0 : i32
    %c0_i32_1 = arith.constant 0 : i32
    return %2, %c0_i32_0 : i32, i32
  }
  func.func @transform_2(%arg0: i32, %arg1: i32) -> (i32, i32) {
    %c1_i32 = arith.constant 1 : i32
    %0 = arith.muli %arg0, %c1_i32 : i32
    %1 = arith.addi %0, %arg1 : i32
    %c0_i32 = arith.constant 0 : i32
    %2 = arith.minsi %1, %c0_i32 : i32
    %c0_i32_0 = arith.constant 0 : i32
    %c0_i32_1 = arith.constant 0 : i32
    return %2, %c0_i32_0 : i32, i32
  }
  func.func @transform_3(%arg0: i32, %arg1: i32) -> (i32, i32, i32) {
    %c0_i32 = arith.constant 0 : i32
    %c0_i32_0 = arith.constant 0 : i32
    %c0_i32_1 = arith.constant 0 : i32
    return %arg0, %c0_i32, %c0_i32_0 : i32, i32, i32
  }
}

</mosaic_0001>

<llo_original>
// kernel: tpu_custom_call.1
$region0: #{tpu_custom_call.1}
  #allocation0 [shape = 'u32[]', space=smem, size = 0x4, offset = 0x4, fixed_abs, tag = 'smem constant byte address 0x4 - core index']
  #allocation1 [shape = 'u32[72,128]{1,0:T(1,128)}', space=vmem, size = 0x9000, scoped, tag = 'internal scratch']
  %s0 = inlined_call_operand.vmem [shape: f32[2,128], index: 0, kind: input, shape index: {}]
  %s1 = inlined_call_operand.vmem [shape: f32[128,8], index: 1, kind: input, shape index: {}]
  %s2 = inlined_call_operand.vmem [shape: s32[128,1], index: 2, kind: input, shape index: {}]
  %s3 = inlined_call_operand.vmem [shape: f32[1,3,128], index: 3, kind: output, shape index: {}]
  %s4 = sld [smem:[#allocation0]]
  $region26: #{tpu_custom_call.1} parent=0
    _
  %s6 = ssub.s32 1, %s4
  %s7 = scalar_select 0, %s6, %s4
  // Predicated region
  $region2: #{tpu_custom_call.1} parent=0 // pred_check
    _
  $region3: #{tpu_custom_call.1} parent=0 // pred_check_branch
    %9 = sbr.rel (0) target = $region5
  $region4: #{tpu_custom_call.1} parent=0 // pred_region
    _
  $region5: #{tpu_custom_call.1} parent=0 // pred_fallthru
    _
  // Predicated region
  $region6: #{tpu_custom_call.1} parent=0 // pred_check
    _
  $region7: #{tpu_custom_call.1} parent=0 // pred_check_branch
    %11 = sbr.rel (0) target = $region9
  $region8: #{tpu_custom_call.1} parent=0 // pred_region
    %s12 = sadd.s32 0, 0
    %p13 = scmp.lt.s32.totalorder %s12, 0
    %s14 = scalar_select %p13, %s12, 0
    %s15 = smul.u32 16, %s14
    %p16 = scmp.lt.s32.totalorder %s15, 15
    %s17 = scalar_select %p16, %s15, 15
    %s18 = smul.addr %s17, 8
    %s19 = scalar_lea.vmem %s1, %s18
    %s20 = sadd.s32 0, 0
    %p21 = scmp.lt.s32.totalorder %s20, 0
    %s22 = scalar_select %p21, %s20, 0
    %s23 = smul.u32 16, %s22
  $region9: #{tpu_custom_call.1} parent=0 // pred_fallthru
    _
  // Predicated region
  $region10: #{tpu_custom_call.1} parent=0 // pred_check
    _
  $region11: #{tpu_custom_call.1} parent=0 // pred_check_branch
    %25 = sbr.rel (0) target = $region13
  $region12: #{tpu_custom_call.1} parent=0 // pred_region
    %s26 = sadd.s32 0, 0
    %p27 = scmp.lt.s32.totalorder %s26, 0
    %s28 = scalar_select %p27, %s26, 0
    %s29 = smul.u32 16, %s28
    %p30 = scmp.lt.s32.totalorder %s29, 15
    %s31 = scalar_select %p30, %s29, 15
    %s32 = smul.addr %s31, 8
    %s33 = scalar_lea.vmem %s2, %s32
    %s34 = sadd.s32 0, 0
    %p35 = scmp.lt.s32.totalorder %s34, 0
    %s36 = scalar_select %p35, %s34, 0
    %s37 = smul.u32 16, %s36
  $region13: #{tpu_custom_call.1} parent=0 // pred_fallthru
    _
  %s38 = sadd.s32 0, 0
  %p39 = scmp.lt.s32.totalorder %s38, 0
  %s40 = scalar_select %p39, %s38, 0
  %s41 = smul.u32 16, %s40
  %p42 = scmp.lt.s32.totalorder %s41, 15
  %s43 = scalar_select %p42, %s41, 15
  %s44 = smul.addr %s43, 8
  %s45 = scalar_lea.vmem %s1, %s44
  %s46 = sadd.s32 0, 0
  %p47 = scmp.lt.s32.totalorder %s46, 0
  %s48 = scalar_select %p47, %s46, 0
  %s49 = smul.u32 16, %s48
  %p50 = scmp.lt.s32.totalorder %s49, 15
  %s51 = scalar_select %p50, %s49, 15
  %s52 = smul.addr %s51, 8
  %s53 = scalar_lea.vmem %s2, %s52
  %s54 = sadd.s32 0, 0
  %p55 = scmp.lt.s32.totalorder %s54, 0
  %s56 = scalar_select %p55, %s54, 0
  %s57 = smul.u32 16, %s56
  %p58 = scmp.lt.s32.totalorder %s57, 15
  %s59 = scalar_select %p58, %s57, 15
  %s60 = smul.addr %s59, 8
  %s61 = scalar_lea.vmem %s1, %s60
  %s62 = sadd.s32 0, 0
  %p63 = scmp.lt.s32.totalorder %s62, 0
  %s64 = scalar_select %p63, %s62, 0
  %s65 = smul.u32 16, %s64
  %s66 = sadd.s32 0, 0
  %p67 = scmp.lt.s32.totalorder %s66, 0
  %s68 = scalar_select %p67, %s66, 0
  %s69 = smul.u32 16, %s68
  %p70 = scmp.lt.s32.totalorder %s69, 15
  %s71 = scalar_select %p70, %s69, 15
  %s72 = smul.addr %s71, 8
  %s73 = scalar_lea.vmem %s2, %s72
  %s74 = sadd.s32 0, 0
  %p75 = scmp.lt.s32.totalorder %s74, 0
  %s76 = scalar_select %p75, %s74, 0
  %s77 = smul.u32 16, %s76
  %p78 = scmp.eq.s32.totalorder 0, 0
  // Predicated region
  $region14: #{tpu_custom_call.1} parent=0 // pred_check
    %p79 = pneg %p78
  $region15: #{tpu_custom_call.1} parent=0 // pred_check_branch
    %81 = sbr.rel (%p79) target = $region17
  $region16: #{tpu_custom_call.1} parent=0 // pred_region
    %82 = vst [vmem:[%s3] sm:$0x7] 0.0
  $region17: #{tpu_custom_call.1} parent=0 // pred_fallthru
    _
  %v83 = vld [vmem:[%s61] sm:$0xff]
  %v84 = vld [vmem:[%s61 + $0x8] sm:$0xff]
  %v85 = vld [vmem:[%s61 + $0x10] sm:$0xff]
  %v86 = vld [vmem:[%s61 + $0x18] sm:$0xff]
  %v87 = vld [vmem:[%s61 + $0x20] sm:$0xff]
  %v88 = vld [vmem:[%s61 + $0x28] sm:$0xff]
  %v89 = vld [vmem:[%s61 + $0x30] sm:$0xff]
  %v90 = vld [vmem:[%s61 + $0x38] sm:$0xff]
  %v91 = vld [vmem:[%s61 + $0x40] sm:$0xff]
  %v92 = vld [vmem:[%s61 + $0x48] sm:$0xff]
  %v93 = vld [vmem:[%s61 + $0x50] sm:$0xff]
  %v94 = vld [vmem:[%s61 + $0x58] sm:$0xff]
  %v95 = vld [vmem:[%s61 + $0x60] sm:$0xff]
  %v96 = vld [vmem:[%s61 + $0x68] sm:$0xff]
  %v97 = vld [vmem:[%s61 + $0x70] sm:$0xff]
  %v98 = vld [vmem:[%s61 + $0x78] sm:$0xff]
  %v99 = vld [vmem:[%s73] sm:$0xff]
  %v100 = vld [vmem:[%s73 + $0x8] sm:$0xff]
  %v101 = vld [vmem:[%s73 + $0x10] sm:$0xff]
  %v102 = vld [vmem:[%s73 + $0x18] sm:$0xff]
  %v103 = vld [vmem:[%s73 + $0x20] sm:$0xff]
  %v104 = vld [vmem:[%s73 + $0x28] sm:$0xff]
  %v105 = vld [vmem:[%s73 + $0x30] sm:$0xff]
  %v106 = vld [vmem:[%s73 + $0x38] sm:$0xff]
  %v107 = vld [vmem:[%s73 + $0x40] sm:$0xff]
  %v108 = vld [vmem:[%s73 + $0x48] sm:$0xff]
  %v109 = vld [vmem:[%s73 + $0x50] sm:$0xff]
  %v110 = vld [vmem:[%s73 + $0x58] sm:$0xff]
  %v111 = vld [vmem:[%s73 + $0x60] sm:$0xff]
  %v112 = vld [vmem:[%s73 + $0x68] sm:$0xff]
  %v113 = vld [vmem:[%s73 + $0x70] sm:$0xff]
  %v114 = vld [vmem:[%s73 + $0x78] sm:$0xff]
  %s115 = sadd.s32 0, 0
  %s116 = smul.u32 %s115, 128
  %v117 = vlaneseq
  %v118 = vshrl.u32 %v117, 7
  %v119 = vadd.s32 %v118, 8
  %v120 = vadd.s32 %v118, 16
  %v121 = vadd.s32 %v118, 24
  %v122 = vadd.s32 %v118, 32
  %v123 = vadd.s32 %v118, 40
  %v124 = vadd.s32 %v118, 48
  %v125 = vadd.s32 %v118, 56
  %v126 = vadd.s32 %v118, 64
  %v127 = vadd.s32 %v118, 72
  %v128 = vadd.s32 %v118, 80
  %v129 = vadd.s32 %v118, 88
  %v130 = vadd.s32 %v118, 96
  %v131 = vadd.s32 %v118, 104
  %v132 = vadd.s32 %v118, 112
  %v133 = vadd.s32 %v118, 120
  %v134 = vstv %s116
  %v135 = vadd.s32 %v118, %v134
  %v136 = vadd.s32 %v119, %v134
  %v137 = vadd.s32 %v120, %v134
  %v138 = vadd.s32 %v121, %v134
  %v139 = vadd.s32 %v122, %v134
  %v140 = vadd.s32 %v123, %v134
  %v141 = vadd.s32 %v124, %v134
  %v142 = vadd.s32 %v125, %v134
  %v143 = vadd.s32 %v126, %v134
  %v144 = vadd.s32 %v127, %v134
  %v145 = vadd.s32 %v128, %v134
  %v146 = vadd.s32 %v129, %v134
  %v147 = vadd.s32 %v130, %v134
  %v148 = vadd.s32 %v131, %v134
  %v149 = vadd.s32 %v132, %v134
  %v150 = vadd.s32 %v133, %v134
  %vm151 = vcmp.lt.s32.totalorder %v135, 128
  %vm152 = vcmp.lt.s32.totalorder %v136, 128
  %vm153 = vcmp.lt.s32.totalorder %v137, 128
  %vm154 = vcmp.lt.s32.totalorder %v138, 128
  %vm155 = vcmp.lt.s32.totalorder %v139, 128
  %vm156 = vcmp.lt.s32.totalorder %v140, 128
  %vm157 = vcmp.lt.s32.totalorder %v141, 128
  %vm158 = vcmp.lt.s32.totalorder %v142, 128
  %vm159 = vcmp.lt.s32.totalorder %v143, 128
  %vm160 = vcmp.lt.s32.totalorder %v144, 128
  %vm161 = vcmp.lt.s32.totalorder %v145, 128
  %vm162 = vcmp.lt.s32.totalorder %v146, 128
  %vm163 = vcmp.lt.s32.totalorder %v147, 128
  %vm164 = vcmp.lt.s32.totalorder %v148, 128
  %vm165 = vcmp.lt.s32.totalorder %v149, 128
  %vm166 = vcmp.lt.s32.totalorder %v150, 128
  %vm167 = vcmask 64512
  %v168 = vsel %vm167, %v83, -inf
  %169 = vmax.xlane.f32.xlu0 %v168
  %v170 = vpop.xlane.xlu0 %169
  %v171 = vsel %vm167, %v84, -inf
  %172 = vmax.xlane.f32.xlu0 %v171
  %v173 = vpop.xlane.xlu0 %172
  %v174 = vsel %vm167, %v85, -inf
  %175 = vmax.xlane.f32.xlu0 %v174
  %v176 = vpop.xlane.xlu0 %175
  %v177 = vsel %vm167, %v86, -inf
  %178 = vmax.xlane.f32.xlu0 %v177
  %v179 = vpop.xlane.xlu0 %178
  %v180 = vsel %vm167, %v87, -inf
  %181 = vmax.xlane.f32.xlu0 %v180
  %v182 = vpop.xlane.xlu0 %181
  %v183 = vsel %vm167, %v88, -inf
  %184 = vmax.xlane.f32.xlu0 %v183
  %v185 = vpop.xlane.xlu0 %184
  %v186 = vsel %vm167, %v89, -inf
  %187 = vmax.xlane.f32.xlu0 %v186
  %v188 = vpop.xlane.xlu0 %187
  %v189 = vsel %vm167, %v90, -inf
  %190 = vmax.xlane.f32.xlu0 %v189
  %v191 = vpop.xlane.xlu0 %190
  %v192 = vsel %vm167, %v91, -inf
  %193 = vmax.xlane.f32.xlu0 %v192
  %v194 = vpop.xlane.xlu0 %193
  %v195 = vsel %vm167, %v92, -inf
  %196 = vmax.xlane.f32.xlu0 %v195
  %v197 = vpop.xlane.xlu0 %196
  %v198 = vsel %vm167, %v93, -inf
  %199 = vmax.xlane.f32.xlu0 %v198
  %v200 = vpop.xlane.xlu0 %199
  %v201 = vsel %vm167, %v94, -inf
  %202 = vmax.xlane.f32.xlu0 %v201
  %v203 = vpop.xlane.xlu0 %202
  %v204 = vsel %vm167, %v95, -inf
  %205 = vmax.xlane.f32.xlu0 %v204
  %v206 = vpop.xlane.xlu0 %205
  %v207 = vsel %vm167, %v96, -inf
  %208 = vmax.xlane.f32.xlu0 %v207
  %v209 = vpop.xlane.xlu0 %208
  %v210 = vsel %vm167, %v97, -inf
  %211 = vmax.xlane.f32.xlu0 %v210
  %v212 = vpop.xlane.xlu0 %211
  %v213 = vsel %vm167, %v98, -inf
  %214 = vmax.xlane.f32.xlu0 %v213
  %v215 = vpop.xlane.xlu0 %214
  %v216 = vlaneseq
  %v217 = vand.u32 %v216, 127
  %vm218 = vcmp.eq.f32.partialorder %v83, %v170
  %vm219 = vcmp.eq.f32.partialorder %v84, %v173
  %vm220 = vcmp.eq.f32.partialorder %v85, %v176
  %vm221 = vcmp.eq.f32.partialorder %v86, %v179
  %vm222 = vcmp.eq.f32.partialorder %v87, %v182
  %vm223 = vcmp.eq.f32.partialorder %v88, %v185
  %vm224 = vcmp.eq.f32.partialorder %v89, %v188
  %vm225 = vcmp.eq.f32.partialorder %v90, %v191
  %vm226 = vcmp.eq.f32.partialorder %v91, %v194
  %vm227 = vcmp.eq.f32.partialorder %v92, %v197
  %vm228 = vcmp.eq.f32.partialorder %v93, %v200
  %vm229 = vcmp.eq.f32.partialorder %v94, %v203
  %vm230 = vcmp.eq.f32.partialorder %v95, %v206
  %vm231 = vcmp.eq.f32.partialorder %v96, %v209
  %vm232 = vcmp.eq.f32.partialorder %v97, %v212
  %vm233 = vcmp.eq.f32.partialorder %v98, %v215
  %v234 = vsel %vm218, %v217, 8
  %v235 = vsel %vm219, %v217, 8
  %v236 = vsel %vm220, %v217, 8
  %v237 = vsel %vm221, %v217, 8
  %v238 = vsel %vm222, %v217, 8
  %v239 = vsel %vm223, %v217, 8
  %v240 = vsel %vm224, %v217, 8
  %v241 = vsel %vm225, %v217, 8
  %v242 = vsel %vm226, %v217, 8
  %v243 = vsel %vm227, %v217, 8
  %v244 = vsel %vm228, %v217, 8
  %v245 = vsel %vm229, %v217, 8
  %v246 = vsel %vm230, %v217, 8
  %v247 = vsel %vm231, %v217, 8
  %v248 = vsel %vm232, %v217, 8
  %v249 = vsel %vm233, %v217, 8
  %v250 = vsel %vm167, %v234, 2147483647
  %v251 = vand.u32 %v250, 65535
  %v252 = vshra.s32 %v250, 16
  %v253 = vcvt.s32.f32 %v251
  %v254 = vcvt.s32.f32 %v252
  %255 = vmin.xlane.f32.xlu0 %v254
  %v256 = vpop.xlane.xlu0 %255
  %vm257 = vcmp.eq.f32.partialorder %v254, %v256
  %v258 = vsel %vm257, %v253, inf
  %259 = vmin.xlane.f32.xlu0 %v258
  %v260 = vpop.xlane.xlu0 %259
  %v261 = vcvt.f32.s32 %v260
  %v262 = vcvt.f32.s32 %v256
  %v263 = vshll.u32 %v262, 16
  %v264 = vadd.s32 %v263, %v261
  %v265 = vsel %vm167, %v235, 2147483647
  %v266 = vand.u32 %v265, 65535
  %v267 = vshra.s32 %v265, 16
  %v268 = vcvt.s32.f32 %v266
  %v269 = vcvt.s32.f32 %v267
  %270 = vmin.xlane.f32.xlu0 %v269
  %v271 = vpop.xlane.xlu0 %270
  %vm272 = vcmp.eq.f32.partialorder %v269, %v271
  %v273 = vsel %vm272, %v268, inf
  %274 = vmin.xlane.f32.xlu0 %v273
  %v275 = vpop.xlane.xlu0 %274
  %v276 = vcvt.f32.s32 %v275
  %v277 = vcvt.f32.s32 %v271
  %v278 = vshll.u32 %v277, 16
  %v279 = vadd.s32 %v278, %v276
  %v280 = vsel %vm167, %v236, 2147483647
  %v281 = vand.u32 %v280, 65535
  %v282 = vshra.s32 %v280, 16
  %v283 = vcvt.s32.f32 %v281
  %v284 = vcvt.s32.f32 %v282
  %285 = vmin.xlane.f32.xlu0 %v284
  %v286 = vpop.xlane.xlu0 %285
  %vm287 = vcmp.eq.f32.partialorder %v284, %v286
  %v288 = vsel %vm287, %v283, inf
  %289 = vmin.xlane.f32.xlu0 %v288
  %v290 = vpop.xlane.xlu0 %289
  %v291 = vcvt.f32.s32 %v290
  %v292 = vcvt.f32.s32 %v286
  %v293 = vshll.u32 %v292, 16
  %v294 = vadd.s32 %v293, %v291
  %v295 = vsel %vm167, %v237, 2147483647
  %v296 = vand.u32 %v295, 65535
  %v297 = vshra.s32 %v295, 16
  %v298 = vcvt.s32.f32 %v296
  %v299 = vcvt.s32.f32 %v297
  %300 = vmin.xlane.f32.xlu0 %v299
  %v301 = vpop.xlane.xlu0 %300
  %vm302 = vcmp.eq.f32.partialorder %v299, %v301
  %v303 = vsel %vm302, %v298, inf
  %304 = vmin.xlane.f32.xlu0 %v303
  %v305 = vpop.xlane.xlu0 %304
  %v306 = vcvt.f32.s32 %v305
  %v307 = vcvt.f32.s32 %v301
  %v308 = vshll.u32 %v307, 16
  %v309 = vadd.s32 %v308, %v306
  %v310 = vsel %vm167, %v238, 2147483647
  %v311 = vand.u32 %v310, 65535
  %v312 = vshra.s32 %v310, 16
  %v313 = vcvt.s32.f32 %v311
  %v314 = vcvt.s32.f32 %v312
  %315 = vmin.xlane.f32.xlu0 %v314
  %v316 = vpop.xlane.xlu0 %315
  %vm317 = vcmp.eq.f32.partialorder %v314, %v316
  %v318 = vsel %vm317, %v313, inf
  %319 = vmin.xlane.f32.xlu0 %v318
  %v320 = vpop.xlane.xlu0 %319
  %v321 = vcvt.f32.s32 %v320
  %v322 = vcvt.f32.s32 %v316
  %v323 = vshll.u32 %v322, 16
  %v324 = vadd.s32 %v323, %v321
  %v325 = vsel %vm167, %v239, 2147483647
  %v326 = vand.u32 %v325, 65535
  %v327 = vshra.s32 %v325, 16
  %v328 = vcvt.s32.f32 %v326
  %v329 = vcvt.s32.f32 %v327
  %330 = vmin.xlane.f32.xlu0 %v329
  %v331 = vpop.xlane.xlu0 %330
  %vm332 = vcmp.eq.f32.partialorder %v329, %v331
  %v333 = vsel %vm332, %v328, inf
  %334 = vmin.xlane.f32.xlu0 %v333
  %v335 = vpop.xlane.xlu0 %334
  %v336 = vcvt.f32.s32 %v335
  %v337 = vcvt.f32.s32 %v331
  %v338 = vshll.u32 %v337, 16
  %v339 = vadd.s32 %v338, %v336
  %v340 = vsel %vm167, %v240, 2147483647
  %v341 = vand.u32 %v340, 65535
  %v342 = vshra.s32 %v340, 16
  %v343 = vcvt.s32.f32 %v341
  %v344 = vcvt.s32.f32 %v342
  %345 = vmin.xlane.f32.xlu0 %v344
  %v346 = vpop.xlane.xlu0 %345
  %vm347 = vcmp.eq.f32.partialorder %v344, %v346
  %v348 = vsel %vm347, %v343, inf
  %349 = vmin.xlane.f32.xlu0 %v348
  %v350 = vpop.xlane.xlu0 %349
  %v351 = vcvt.f32.s32 %v350
  %v352 = vcvt.f32.s32 %v346
  %v353 = vshll.u32 %v352, 16
  %v354 = vadd.s32 %v353, %v351
  %v355 = vsel %vm167, %v241, 2147483647
  %v356 = vand.u32 %v355, 65535
  %v357 = vshra.s32 %v355, 16
  %v358 = vcvt.s32.f32 %v356
  %v359 = vcvt.s32.f32 %v357
  %360 = vmin.xlane.f32.xlu0 %v359
  %v361 = vpop.xlane.xlu0 %360
  %vm362 = vcmp.eq.f32.partialorder %v359, %v361
  %v363 = vsel %vm362, %v358, inf
  %364 = vmin.xlane.f32.xlu0 %v363
  %v365 = vpop.xlane.xlu0 %364
  %v366 = vcvt.f32.s32 %v365
  %v367 = vcvt.f32.s32 %v361
  %v368 = vshll.u32 %v367, 16
  %v369 = vadd.s32 %v368, %v366
  %v370 = vsel %vm167, %v242, 2147483647
  %v371 = vand.u32 %v370, 65535
  %v372 = vshra.s32 %v370, 16
  %v373 = vcvt.s32.f32 %v371
  %v374 = vcvt.s32.f32 %v372
  %375 = vmin.xlane.f32.xlu0 %v374
  %v376 = vpop.xlane.xlu0 %375
  %vm377 = vcmp.eq.f32.partialorder %v374, %v376
  %v378 = vsel %vm377, %v373, inf
  %379 = vmin.xlane.f32.xlu0 %v378
  %v380 = vpop.xlane.xlu0 %379
  %v381 = vcvt.f32.s32 %v380
  %v382 = vcvt.f32.s32 %v376
  %v383 = vshll.u32 %v382, 16
  %v384 = vadd.s32 %v383, %v381
  %v385 = vsel %vm167, %v243, 2147483647
  %v386 = vand.u32 %v385, 65535
  %v387 = vshra.s32 %v385, 16
  %v388 = vcvt.s32.f32 %v386
  %v389 = vcvt.s32.f32 %v387
  %390 = vmin.xlane.f32.xlu0 %v389
  %v391 = vpop.xlane.xlu0 %390
  %vm392 = vcmp.eq.f32.partialorder %v389, %v391
  %v393 = vsel %vm392, %v388, inf
  %394 = vmin.xlane.f32.xlu0 %v393
  %v395 = vpop.xlane.xlu0 %394
  %v396 = vcvt.f32.s32 %v395
  %v397 = vcvt.f32.s32 %v391
  %v398 = vshll.u32 %v397, 16
  %v399 = vadd.s32 %v398, %v396
  %v400 = vsel %vm167, %v244, 2147483647
  %v401 = vand.u32 %v400, 65535
  %v402 = vshra.s32 %v400, 16
  %v403 = vcvt.s32.f32 %v401
  %v404 = vcvt.s32.f32 %v402
  %405 = vmin.xlane.f32.xlu0 %v404
  %v406 = vpop.xlane.xlu0 %405
  %vm407 = vcmp.eq.f32.partialorder %v404, %v406
  %v408 = vsel %vm407, %v403, inf
  %409 = vmin.xlane.f32.xlu0 %v408
  %v410 = vpop.xlane.xlu0 %409
  %v411 = vcvt.f32.s32 %v410
  %v412 = vcvt.f32.s32 %v406
  %v413 = vshll.u32 %v412, 16
  %v414 = vadd.s32 %v413, %v411
  %v415 = vsel %vm167, %v245, 2147483647
  %v416 = vand.u32 %v415, 65535
  %v417 = vshra.s32 %v415, 16
  %v418 = vcvt.s32.f32 %v416
  %v419 = vcvt.s32.f32 %v417
  %420 = vmin.xlane.f32.xlu0 %v419
  %v421 = vpop.xlane.xlu0 %420
  %vm422 = vcmp.eq.f32.partialorder %v419, %v421
  %v423 = vsel %vm422, %v418, inf
  %424 = vmin.xlane.f32.xlu0 %v423
  %v425 = vpop.xlane.xlu0 %424
  %v426 = vcvt.f32.s32 %v425
  %v427 = vcvt.f32.s32 %v421
  %v428 = vshll.u32 %v427, 16
  %v429 = vadd.s32 %v428, %v426
  %v430 = vsel %vm167, %v246, 2147483647
  %v431 = vand.u32 %v430, 65535
  %v432 = vshra.s32 %v430, 16
  %v433 = vcvt.s32.f32 %v431
  %v434 = vcvt.s32.f32 %v432
  %435 = vmin.xlane.f32.xlu0 %v434
  %v436 = vpop.xlane.xlu0 %435
  %vm437 = vcmp.eq.f32.partialorder %v434, %v436
  %v438 = vsel %vm437, %v433, inf
  %439 = vmin.xlane.f32.xlu0 %v438
  %v440 = vpop.xlane.xlu0 %439
  %v441 = vcvt.f32.s32 %v440
  %v442 = vcvt.f32.s32 %v436
  %v443 = vshll.u32 %v442, 16
  %v444 = vadd.s32 %v443, %v441
  %v445 = vsel %vm167, %v247, 2147483647
  %v446 = vand.u32 %v445, 65535
  %v447 = vshra.s32 %v445, 16
  %v448 = vcvt.s32.f32 %v446
  %v449 = vcvt.s32.f32 %v447
  %450 = vmin.xlane.f32.xlu0 %v449
  %v451 = vpop.xlane.xlu0 %450
  %vm452 = vcmp.eq.f32.partialorder %v449, %v451
  %v453 = vsel %vm452, %v448, inf
  %454 = vmin.xlane.f32.xlu0 %v453
  %v455 = vpop.xlane.xlu0 %454
  %v456 = vcvt.f32.s32 %v455
  %v457 = vcvt.f32.s32 %v451
  %v458 = vshll.u32 %v457, 16
  %v459 = vadd.s32 %v458, %v456
  %v460 = vsel %vm167, %v248, 2147483647
  %v461 = vand.u32 %v460, 65535
  %v462 = vshra.s32 %v460, 16
  %v463 = vcvt.s32.f32 %v461
  %v464 = vcvt.s32.f32 %v462
  %465 = vmin.xlane.f32.xlu0 %v464
  %v466 = vpop.xlane.xlu0 %465
  %vm467 = vcmp.eq.f32.partialorder %v464, %v466
  %v468 = vsel %vm467, %v463, inf
  %469 = vmin.xlane.f32.xlu0 %v468
  %v470 = vpop.xlane.xlu0 %469
  %v471 = vcvt.f32.s32 %v470
  %v472 = vcvt.f32.s32 %v466
  %v473 = vshll.u32 %v472, 16
  %v474 = vadd.s32 %v473, %v471
  %v475 = vsel %vm167, %v249, 2147483647
  %v476 = vand.u32 %v475, 65535
  %v477 = vshra.s32 %v475, 16
  %v478 = vcvt.s32.f32 %v476
  %v479 = vcvt.s32.f32 %v477
  %480 = vmin.xlane.f32.xlu0 %v479
  %v481 = vpop.xlane.xlu0 %480
  %vm482 = vcmp.eq.f32.partialorder %v479, %v481
  %v483 = vsel %vm482, %v478, inf
  %484 = vmin.xlane.f32.xlu0 %v483
  %v485 = vpop.xlane.xlu0 %484
  %v486 = vcvt.f32.s32 %v485
  %v487 = vcvt.f32.s32 %v481
  %v488 = vshll.u32 %v487, 16
  %v489 = vadd.s32 %v488, %v486
  %vm490 = vcmp.eq.s32.totalorder %v264, %v99
  %vm491 = vcmp.eq.s32.totalorder %v279, %v100
  %vm492 = vcmp.eq.s32.totalorder %v294, %v101
  %vm493 = vcmp.eq.s32.totalorder %v309, %v102
  %vm494 = vcmp.eq.s32.totalorder %v324, %v103
  %vm495 = vcmp.eq.s32.totalorder %v339, %v104
  %vm496 = vcmp.eq.s32.totalorder %v354, %v105
  %vm497 = vcmp.eq.s32.totalorder %v369, %v106
  %vm498 = vcmp.eq.s32.totalorder %v384, %v107
  %vm499 = vcmp.eq.s32.totalorder %v399, %v108
  %vm500 = vcmp.eq.s32.totalorder %v414, %v109
  %vm501 = vcmp.eq.s32.totalorder %v429, %v110
  %vm502 = vcmp.eq.s32.totalorder %v444, %v111
  %vm503 = vcmp.eq.s32.totalorder %v459, %v112
  %vm504 = vcmp.eq.s32.totalorder %v474, %v113
  %vm505 = vcmp.eq.s32.totalorder %v489, %v114
  %v506 = vsel %vm490, 1, 0
  %v507 = vsel %vm491, 1, 0
  %v508 = vsel %vm492, 1, 0
  %v509 = vsel %vm493, 1, 0
  %v510 = vsel %vm494, 1, 0
  %v511 = vsel %vm495, 1, 0
  %v512 = vsel %vm496, 1, 0
  %v513 = vsel %vm497, 1, 0
  %v514 = vsel %vm498, 1, 0
  %v515 = vsel %vm499, 1, 0
  %v516 = vsel %vm500, 1, 0
  %v517 = vsel %vm501, 1, 0
  %v518 = vsel %vm502, 1, 0
  %v519 = vsel %vm503, 1, 0
  %v520 = vsel %vm504, 1, 0
  %v521 = vsel %vm505, 1, 0
  %v522 = vcvt.s32.f32 %v506
  %v523 = vcvt.s32.f32 %v507
  %v524 = vcvt.s32.f32 %v508
  %v525 = vcvt.s32.f32 %v509
  %v526 = vcvt.s32.f32 %v510
  %v527 = vcvt.s32.f32 %v511
  %v528 = vcvt.s32.f32 %v512
  %v529 = vcvt.s32.f32 %v513
  %v530 = vcvt.s32.f32 %v514
  %v531 = vcvt.s32.f32 %v515
  %v532 = vcvt.s32.f32 %v516
  %v533 = vcvt.s32.f32 %v517
  %v534 = vcvt.s32.f32 %v518
  %v535 = vcvt.s32.f32 %v519
  %v536 = vcvt.s32.f32 %v520
  %v537 = vcvt.s32.f32 %v521
  %v538 = vsel %vm151, %v170, 0.0
  %v539 = vsel %vm152, %v173, 0.0
  %v540 = vsel %vm153, %v176, 0.0
  %v541 = vsel %vm154, %v179, 0.0
  %v542 = vsel %vm155, %v182, 0.0
  %v543 = vsel %vm156, %v185, 0.0
  %v544 = vsel %vm157, %v188, 0.0
  %v545 = vsel %vm158, %v191, 0.0
  %v546 = vsel %vm159, %v194, 0.0
  %v547 = vsel %vm160, %v197, 0.0
  %v548 = vsel %vm161, %v200, 0.0
  %v549 = vsel %vm162, %v203, 0.0
  %v550 = vsel %vm163, %v206, 0.0
  %v551 = vsel %vm164, %v209, 0.0
  %v552 = vsel %vm165, %v212, 0.0
  %v553 = vsel %vm166, %v215, 0.0
  %v554 = vsel %vm151, %v522, 0.0
  %v555 = vsel %vm152, %v523, 0.0
  %v556 = vsel %vm153, %v524, 0.0
  %v557 = vsel %vm154, %v525, 0.0
  %v558 = vsel %vm155, %v526, 0.0
  %v559 = vsel %vm156, %v527, 0.0
  %v560 = vsel %vm157, %v528, 0.0
  %v561 = vsel %vm158, %v529, 0.0
  %v562 = vsel %vm159, %v530, 0.0
  %v563 = vsel %vm160, %v531, 0.0
  %v564 = vsel %vm161, %v532, 0.0
  %v565 = vsel %vm162, %v533, 0.0
  %v566 = vsel %vm163, %v534, 0.0
  %v567 = vsel %vm164, %v535, 0.0
  %v568 = vsel %vm165, %v536, 0.0
  %v569 = vsel %vm166, %v537, 0.0
  %v570 = vld [vmem:[%s0] sm:$0x1]
  %v571 = vld [vmem:[%s0 + $0x1] sm:$0x1]
  %v572 = vperm.slane %v570, 0
  %vm573 = vcmp.gt.f32.partialorder %v538, %v572
  %vm574 = vcmp.gt.f32.partialorder %v539, %v572
  %vm575 = vcmp.gt.f32.partialorder %v540, %v572
  %vm576 = vcmp.gt.f32.partialorder %v541, %v572
  %vm577 = vcmp.gt.f32.partialorder %v542, %v572
  %vm578 = vcmp.gt.f32.partialorder %v543, %v572
  %vm579 = vcmp.gt.f32.partialorder %v544, %v572
  %vm580 = vcmp.gt.f32.partialorder %v545, %v572
  %vm581 = vcmp.gt.f32.partialorder %v546, %v572
  %vm582 = vcmp.gt.f32.partialorder %v547, %v572
  %vm583 = vcmp.gt.f32.partialorder %v548, %v572
  %vm584 = vcmp.gt.f32.partialorder %v549, %v572
  %vm585 = vcmp.gt.f32.partialorder %v550, %v572
  %vm586 = vcmp.gt.f32.partialorder %v551, %v572
  %vm587 = vcmp.gt.f32.partialorder %v552, %v572
  %vm588 = vcmp.gt.f32.partialorder %v553, %v572
  %v589 = vperm.slane %v571, 0
  %vm590 = vcmp.le.f32.partialorder %v538, %v589
  %vm591 = vcmp.le.f32.partialorder %v539, %v589
  %vm592 = vcmp.le.f32.partialorder %v540, %v589
  %vm593 = vcmp.le.f32.partialorder %v541, %v589
  %vm594 = vcmp.le.f32.partialorder %v542, %v589
  %vm595 = vcmp.le.f32.partialorder %v543, %v589
  %vm596 = vcmp.le.f32.partialorder %v544, %v589
  %vm597 = vcmp.le.f32.partialorder %v545, %v589
  %vm598 = vcmp.le.f32.partialorder %v546, %v589
  %vm599 = vcmp.le.f32.partialorder %v547, %v589
  %vm600 = vcmp.le.f32.partialorder %v548, %v589
  %vm601 = vcmp.le.f32.partialorder %v549, %v589
  %vm602 = vcmp.le.f32.partialorder %v550, %v589
  %vm603 = vcmp.le.f32.partialorder %v551, %v589
  %vm604 = vcmp.le.f32.partialorder %v552, %v589
  %vm605 = vcmp.le.f32.partialorder %v553, %v589
  %vm606 = vmand %vm573, %vm590
  %vm607 = vmand %vm574, %vm591
  %vm608 = vmand %vm575, %vm592
  %vm609 = vmand %vm576, %vm593
  %vm610 = vmand %vm577, %vm594
  %vm611 = vmand %vm578, %vm595
  %vm612 = vmand %vm579, %vm596
  %vm613 = vmand %vm580, %vm597
  %vm614 = vmand %vm581, %vm598
  %vm615 = vmand %vm582, %vm599
  %vm616 = vmand %vm583, %vm600
  %vm617 = vmand %vm584, %vm601
  %vm618 = vmand %vm585, %vm602
  %vm619 = vmand %vm586, %vm603
  %vm620 = vmand %vm587, %vm604
  %vm621 = vmand %vm588, %vm605
  %v622 = vsel %vm606, 1, 0
  %v623 = vsel %vm607, 1, 0
  %v624 = vsel %vm608, 1, 0
  %v625 = vsel %vm609, 1, 0
  %v626 = vsel %vm610, 1, 0
  %v627 = vsel %vm611, 1, 0
  %v628 = vsel %vm612, 1, 0
  %v629 = vsel %vm613, 1, 0
  %v630 = vsel %vm614, 1, 0
  %v631 = vsel %vm615, 1, 0
  %v632 = vsel %vm616, 1, 0
  %v633 = vsel %vm617, 1, 0
  %v634 = vsel %vm618, 1, 0
  %v635 = vsel %vm619, 1, 0
  %v636 = vsel %vm620, 1, 0
  %v637 = vsel %vm621, 1, 0
  %v638 = vcvt.s32.f32 %v622
  %v639 = vcvt.s32.f32 %v623
  %v640 = vcvt.s32.f32 %v624
  %v641 = vcvt.s32.f32 %v625
  %v642 = vcvt.s32.f32 %v626
  %v643 = vcvt.s32.f32 %v627
  %v644 = vcvt.s32.f32 %v628
  %v645 = vcvt.s32.f32 %v629
  %v646 = vcvt.s32.f32 %v630
  %v647 = vcvt.s32.f32 %v631
  %v648 = vcvt.s32.f32 %v632
  %v649 = vcvt.s32.f32 %v633
  %v650 = vcvt.s32.f32 %v634
  %v651 = vcvt.s32.f32 %v635
  %v652 = vcvt.s32.f32 %v636
  %v653 = vcvt.s32.f32 %v637
  %v654 = vld [vmem:[%s3] sm:$0x1]
  %v655 = vadd.f32 %v638, %v639
  %v656 = vadd.f32 %v655, %v640
  %v657 = vadd.f32 %v656, %v641
  %v658 = vadd.f32 %v657, %v642
  %v659 = vadd.f32 %v658, %v643
  %v660 = vadd.f32 %v659, %v644
  %v661 = vadd.f32 %v660, %v645
  %v662 = vadd.f32 %v661, %v646
  %v663 = vadd.f32 %v662, %v647
  %v664 = vadd.f32 %v663, %v648
  %v665 = vadd.f32 %v664, %v649
  %v666 = vadd.f32 %v665, %v650
  %v667 = vadd.f32 %v666, %v651
  %v668 = vadd.f32 %v667, %v652
  %v669 = vadd.f32 %v668, %v653
  %v670 = vrot.slane %v669, 4
  %v671 = vadd.f32 %v669, %v670
  %v672 = vrot.slane %v671, 2
  %v673 = vadd.f32 %v671, %v672
  %v674 = vrot.slane %v673, 1
  %v675 = vadd.f32 %v673, %v674
  %v676 = vadd.f32 %v654, %v675
  %677 = vst [vmem:[%s3] sm:$0x1] %v676
  %v678 = vld [vmem:[%s3 + $0x1] sm:$0x1]
  %v679 = vmul.f32 %v638, %v538
  %v680 = vmul.f32 %v639, %v539
  %v681 = vmul.f32 %v640, %v540
  %v682 = vmul.f32 %v641, %v541
  %v683 = vmul.f32 %v642, %v542
  %v684 = vmul.f32 %v643, %v543
  %v685 = vmul.f32 %v644, %v544
  %v686 = vmul.f32 %v645, %v545
  %v687 = vmul.f32 %v646, %v546
  %v688 = vmul.f32 %v647, %v547
  %v689 = vmul.f32 %v648, %v548
  %v690 = vmul.f32 %v649, %v549
  %v691 = vmul.f32 %v650, %v550
  %v692 = vmul.f32 %v651, %v551
  %v693 = vmul.f32 %v652, %v552
  %v694 = vmul.f32 %v653, %v553
  %v695 = vadd.f32 %v679, %v680
  %v696 = vadd.f32 %v695, %v681
  %v697 = vadd.f32 %v696, %v682
  %v698 = vadd.f32 %v697, %v683
  %v699 = vadd.f32 %v698, %v684
  %v700 = vadd.f32 %v699, %v685
  %v701 = vadd.f32 %v700, %v686
  %v702 = vadd.f32 %v701, %v687
  %v703 = vadd.f32 %v702, %v688
  %v704 = vadd.f32 %v703, %v689
  %v705 = vadd.f32 %v704, %v690
  %v706 = vadd.f32 %v705, %v691
  %v707 = vadd.f32 %v706, %v692
  %v708 = vadd.f32 %v707, %v693
  %v709 = vadd.f32 %v708, %v694
  %v710 = vrot.slane %v709, 4
  %v711 = vadd.f32 %v709, %v710
  %v712 = vrot.slane %v711, 2
  %v713 = vadd.f32 %v711, %v712
  %v714 = vrot.slane %v713, 1
  %v715 = vadd.f32 %v713, %v714
  %v716 = vadd.f32 %v678, %v715
  %717 = vst [vmem:[%s3 + $0x1] sm:$0x1] %v716
  %v718 = vld [vmem:[%s3 + $0x2] sm:$0x1]
  %720 = vset.pattern.permute.xlu0 0
  %721 = vperm.xlu0 %720, %v554
  %v722 = vpop.permute.xlu0 %721
  %725 = vset.pattern.permute.xlu0 0
  %726 = vperm.xlu0 %725, %v555
  %v727 = vpop.permute.xlu0 %726
  %730 = vset.pattern.permute.xlu0 0
  %731 = vperm.xlu0 %730, %v556
  %v732 = vpop.permute.xlu0 %731
  %735 = vset.pattern.permute.xlu0 0
  %736 = vperm.xlu0 %735, %v557
  %v737 = vpop.permute.xlu0 %736
  %740 = vset.pattern.permute.xlu0 0
  %741 = vperm.xlu0 %740, %v558
  %v742 = vpop.permute.xlu0 %741
  %745 = vset.pattern.permute.xlu0 0
  %746 = vperm.xlu0 %745, %v559
  %v747 = vpop.permute.xlu0 %746
  %750 = vset.pattern.permute.xlu0 0
  %751 = vperm.xlu0 %750, %v560
  %v752 = vpop.permute.xlu0 %751
  %755 = vset.pattern.permute.xlu0 0
  %756 = vperm.xlu0 %755, %v561
  %v757 = vpop.permute.xlu0 %756
  %760 = vset.pattern.permute.xlu0 0
  %761 = vperm.xlu0 %760, %v562
  %v762 = vpop.permute.xlu0 %761
  %765 = vset.pattern.permute.xlu0 0
  %766 = vperm.xlu0 %765, %v563
  %v767 = vpop.permute.xlu0 %766
  %770 = vset.pattern.permute.xlu0 0
  %771 = vperm.xlu0 %770, %v564
  %v772 = vpop.permute.xlu0 %771
  %775 = vset.pattern.permute.xlu0 0
  %776 = vperm.xlu0 %775, %v565
  %v777 = vpop.permute.xlu0 %776
  %780 = vset.pattern.permute.xlu0 0
  %781 = vperm.xlu0 %780, %v566
  %v782 = vpop.permute.xlu0 %781
  %785 = vset.pattern.permute.xlu0 0
  %786 = vperm.xlu0 %785, %v567
  %v787 = vpop.permute.xlu0 %786
  %790 = vset.pattern.permute.xlu0 0
  %791 = vperm.xlu0 %790, %v568
  %v792 = vpop.permute.xlu0 %791
  %795 = vset.pattern.permute.xlu0 0
  %796 = vperm.xlu0 %795, %v569
  %v797 = vpop.permute.xlu0 %796
  %v799 = vmul.f32 %v638, %v722
  %v800 = vmul.f32 %v639, %v727
  %v801 = vmul.f32 %v640, %v732
  %v802 = vmul.f32 %v641, %v737
  %v803 = vmul.f32 %v642, %v742
  %v804 = vmul.f32 %v643, %v747
  %v805 = vmul.f32 %v644, %v752
  %v806 = vmul.f32 %v645, %v757
  %v807 = vmul.f32 %v646, %v762
  %v808 = vmul.f32 %v647, %v767
  %v809 = vmul.f32 %v648, %v772
  %v810 = vmul.f32 %v649, %v777
  %v811 = vmul.f32 %v650, %v782
  %v812 = vmul.f32 %v651, %v787
  %v813 = vmul.f32 %v652, %v792
  %v814 = vmul.f32 %v653, %v797
  %v815 = vadd.f32 %v799, %v800
  %v816 = vadd.f32 %v815, %v801
  %v817 = vadd.f32 %v816, %v802
  %v818 = vadd.f32 %v817, %v803
  %v819 = vadd.f32 %v818, %v804
  %v820 = vadd.f32 %v819, %v805
  %v821 = vadd.f32 %v820, %v806
  %v822 = vadd.f32 %v821, %v807
  %v823 = vadd.f32 %v822, %v808
  %v824 = vadd.f32 %v823, %v809
  %v825 = vadd.f32 %v824, %v810
  %v826 = vadd.f32 %v825, %v811
  %v827 = vadd.f32 %v826, %v812
  %v828 = vadd.f32 %v827, %v813
  %v829 = vadd.f32 %v828, %v814
  %v830 = vrot.slane %v829, 4
  %v831 = vadd.f32 %v829, %v830
  %v832 = vrot.slane %v831, 2
  %v833 = vadd.f32 %v831, %v832
  %v834 = vrot.slane %v833, 1
  %v835 = vadd.f32 %v833, %v834
  %v836 = vadd.f32 %v718, %v835
  %837 = vst [vmem:[%s3 + $0x2] sm:$0x1] %v836
  // Predicated region
  $region18: #{tpu_custom_call.1} parent=0 // pred_check
    _
  $region19: #{tpu_custom_call.1} parent=0 // pred_check_branch
    %839 = sbr.rel (0) target = $region21
  $region20: #{tpu_custom_call.1} parent=0 // pred_region
    _
  $region21: #{tpu_custom_call.1} parent=0 // pred_fallthru
    _
  // Predicated region
  $region22: #{tpu_custom_call.1} parent=0 // pred_check
    _
  $region23: #{tpu_custom_call.1} parent=0 // pred_check_branch
    %841 = sbr.rel (0) target = $region25
  $region24: #{tpu_custom_call.1} parent=0 // pred_region
    _
  $region25: #{tpu_custom_call.1} parent=0 // pred_fallthru
    _

</llo_original>
